<compile_context>
chip_gen: v7x
topology: tpu7x:2x2x1
jax: 0.10.0
libtpu: 0.0.40
codegen_flags: <defaults>
</compile_context>

<pallas_src>
import jax
import jax.numpy as jnp
from jax.experimental import pallas as pl
from jax.experimental.pallas import tpu as pltpu

HIDDEN = 128      # roberta.config.hidden_size (small synthetic size)
FC1 = 512
FC2 = 256
N_CLASSES = 7
N_PAD = 128       # lane-padded output width
VOCAB = 128       # synthetic vocab (lane-dense)
SEQ = 8
BATCH = 2


def _round_up(x, m):
    return ((x + m - 1) // m) * m


def _fused_head_kernel(ids_ref, emb_ref, w1_ref, b1_ref, w2_ref, b2_ref,
                       w3_ref, b3_ref, o_ref):
    """CLS gather (one-hot matmul) + fused 3-layer MLP head.

    relu(x@W1+b1) -> relu(.@W2+b2) -> .@W3+b3, bf16 operands, f32 accumulation.
    """
    # --- CLS-token embedding gather, fused as an MXU one-hot matmul ---------
    ids = ids_ref[...]                                            # (TM, 1) i32
    tm = ids.shape[0]
    iota = jax.lax.broadcasted_iota(jnp.int32, (tm, VOCAB), 1)    # (TM, VOCAB)
    onehot = (iota == ids).astype(jnp.bfloat16)                   # exact 0/1
    x = jnp.dot(onehot, emb_ref[...],
                preferred_element_type=jnp.float32)               # (TM, HIDDEN)

    # --- fc1 + relu ---------------------------------------------------------
    h1 = jnp.dot(x.astype(jnp.bfloat16), w1_ref[...],
                 preferred_element_type=jnp.float32) + b1_ref[...]
    h1 = jnp.maximum(h1, 0.0)

    # --- fc2 + relu ---------------------------------------------------------
    h2 = jnp.dot(h1.astype(jnp.bfloat16), w2_ref[...],
                 preferred_element_type=jnp.float32) + b2_ref[...]
    h2 = jnp.maximum(h2, 0.0)

    # --- out (lane-padded to N_PAD; padded W3/b3 columns are exactly zero) --
    o_ref[...] = (jnp.dot(h2.astype(jnp.bfloat16), w3_ref[...],
                          preferred_element_type=jnp.float32)
                  + b3_ref[...]).astype(o_ref.dtype)


def emotion_head_from_ids(cls_ids, params):
    """cls_ids: (B,) int32 token ids of the CLS position. Returns (B, 7) f32."""
    B = int(cls_ids.shape[0])
    tile_m = min(256, _round_up(B, 8))           # >= 1 sublane, <= one MXU pass
    b_pad = _round_up(B, tile_m)

    ids_pad = jnp.zeros((b_pad, 1), jnp.int32).at[:B, 0].set(
        cls_ids.astype(jnp.int32))

    emb, w1, b1, w2, b2, w3, b3 = (params[k] for k in
                                   ("emb", "w1", "b1", "w2", "b2", "w3", "b3"))

    flops = 2 * b_pad * (VOCAB * HIDDEN + HIDDEN * FC1 + FC1 * FC2 + FC2 * N_PAD)
    bytes_accessed = (
        sum(int(a.size) * a.dtype.itemsize
            for a in (ids_pad, emb, w1, b1, w2, b2, w3, b3))
        + b_pad * N_PAD * 4)

    const = lambda i: (0, 0)        # weights: same block every step -> resident
    out = pl.pallas_call(
        _fused_head_kernel,
        out_shape=jax.ShapeDtypeStruct((b_pad, N_PAD), jnp.float32),
        grid=(b_pad // tile_m,),
        in_specs=[
            pl.BlockSpec((tile_m, 1), lambda i: (i, 0)),   # cls ids
            pl.BlockSpec((VOCAB, HIDDEN), const),          # emb (bf16)
            pl.BlockSpec((HIDDEN, FC1), const),            # w1 (bf16)
            pl.BlockSpec((1, FC1), const),                 # b1 (f32)
            pl.BlockSpec((FC1, FC2), const),               # w2 (bf16)
            pl.BlockSpec((1, FC2), const),                 # b2 (f32)
            pl.BlockSpec((FC2, N_PAD), const),             # w3 (bf16, zero-pad)
            pl.BlockSpec((1, N_PAD), const),               # b3 (f32, zero-pad)
        ],
        out_specs=pl.BlockSpec((tile_m, N_PAD), lambda i: (i, 0)),
        compiler_params=pltpu.CompilerParams(
            dimension_semantics=("parallel",)),
        cost_estimate=pl.CostEstimate(flops=flops, transcendentals=0,
                                      bytes_accessed=bytes_accessed),
    )(ids_pad, emb, w1, b1, w2, b2, w3, b3)

    return out[:B, :N_CLASSES]


def init_params(key):
    """Deterministic init. Weight layout: (in_features, out_features) == PyTorch
    nn.Linear weight transposed; weights stored bf16, biases f32."""
    ks = jax.random.split(key, 4)

    def lin(k, fan_in, fan_out, pad_out=None):
        bound = 1.0 / jnp.sqrt(fan_in)
        kw, kb = jax.random.split(k)
        w = jax.random.uniform(kw, (fan_in, fan_out), jnp.float32, -bound, bound)
        b = jax.random.uniform(kb, (1, fan_out), jnp.float32, -bound, bound)
        if pad_out is not None and pad_out > fan_out:
            # Padded columns must be EXACTLY zero so sliced logits are exact.
            w = jnp.pad(w, ((0, 0), (0, pad_out - fan_out)))
            b = jnp.pad(b, ((0, 0), (0, pad_out - fan_out)))
        return w.astype(jnp.bfloat16), b.astype(jnp.float32)

    w1, b1 = lin(ks[0], HIDDEN, FC1)
    w2, b2 = lin(ks[1], FC1, FC2)
    w3, b3 = lin(ks[2], FC2, N_CLASSES, pad_out=N_PAD)
    # Synthetic "backbone": token-embedding table standing in for RoBERTa.
    emb = (jax.random.normal(ks[3], (VOCAB, HIDDEN), jnp.float32) * 0.02
           ).astype(jnp.bfloat16)
    return {"w1": w1, "b1": b1, "w2": w2, "b2": b2, "w3": w3, "b3": b3,
            "emb": emb}


def emotion_model_forward(input_ids, attention_mask, params):
    """Mirrors EmotionModel.forward (dropout = identity at inference)."""
    # TODO(synk): transformer backbone not reimplemented in Pallas; the CLS
    # hidden state is a synthetic embedding lookup of the first token, fused
    # into the head kernel. attention_mask kept for signature parity only
    # (real RoBERTa does not elementwise-mask its hidden states).
    del attention_mask
    cls_ids = input_ids[:, 0].astype(jnp.int32)
    return emotion_head_from_ids(cls_ids, params)                 # (B, 7)


def _reference_forward(input_ids, params):
    """Pure-JAX reference with the same bf16 rounding points as the kernel."""
    f32 = jnp.float32
    x = params["emb"][input_ids[:, 0]].astype(f32)
    h1 = jnp.maximum(x @ params["w1"].astype(f32) + params["b1"], 0.0)
    h1 = h1.astype(jnp.bfloat16).astype(f32)
    h2 = jnp.maximum(h1 @ params["w2"].astype(f32) + params["b2"], 0.0)
    h2 = h2.astype(jnp.bfloat16).astype(f32)
    out = h2 @ params["w3"].astype(f32) + params["b3"]
    return out[:, :N_CLASSES]


if __name__ == "__main__":
    key = jax.random.PRNGKey(0)
    kp, ki = jax.random.split(key)
    params = init_params(kp)

    input_ids = jax.random.randint(ki, (BATCH, SEQ), 0, VOCAB, dtype=jnp.int32)
    attention_mask = jnp.ones((BATCH, SEQ), dtype=jnp.int32)

    logits = emotion_model_forward(input_ids, attention_mask, params)
    logits = jax.block_until_ready(logits)

    assert logits.shape == (BATCH, N_CLASSES)
    assert logits.dtype == jnp.float32

    ref = _reference_forward(input_ids, params)
    assert jnp.allclose(logits, ref, atol=1e-2, rtol=1e-2), "mismatch vs reference"

    print("KERNEL_OK")
</pallas_src>

<mosaic_0001>
module attributes {stable_mosaic.version = 11 : i64} {
  func.func @_fused_head_kernel(%arg0: i32, %arg1: memref<8x1xi32, #tpu.memory_space<vmem>>, %arg2: memref<128x128xbf16, #tpu.memory_space<vmem>>, %arg3: memref<128x512xbf16, #tpu.memory_space<vmem>>, %arg4: memref<1x512xf32, #tpu.memory_space<vmem>>, %arg5: memref<512x256xbf16, #tpu.memory_space<vmem>>, %arg6: memref<1x256xf32, #tpu.memory_space<vmem>>, %arg7: memref<256x128xbf16, #tpu.memory_space<vmem>>, %arg8: memref<1x128xf32, #tpu.memory_space<vmem>>, %arg9: memref<8x128xf32, #tpu.memory_space<vmem>>) attributes {dimension_semantics = [#tpu.dimension_semantics<parallel>], iteration_bounds = array<i64: 1>, scalar_prefetch = 0 : i64, scratch_operands = 0 : i64, tpu.core_type = #tpu.core_type<tc>, window_params = [{transform_indices = @transform_0, window_bounds = array<i64: 8, 1>}, {pipeline_mode = #tpu.pipeline_mode<synchronous>, transform_indices = @transform_1, window_bounds = array<i64: 128, 128>}, {pipeline_mode = #tpu.pipeline_mode<synchronous>, transform_indices = @transform_2, window_bounds = array<i64: 128, 512>}, {pipeline_mode = #tpu.pipeline_mode<synchronous>, transform_indices = @transform_3, window_bounds = array<i64: 1, 512>}, {pipeline_mode = #tpu.pipeline_mode<synchronous>, transform_indices = @transform_4, window_bounds = array<i64: 512, 256>}, {pipeline_mode = #tpu.pipeline_mode<synchronous>, transform_indices = @transform_5, window_bounds = array<i64: 1, 256>}, {pipeline_mode = #tpu.pipeline_mode<synchronous>, transform_indices = @transform_6, window_bounds = array<i64: 256, 128>}, {pipeline_mode = #tpu.pipeline_mode<synchronous>, transform_indices = @transform_7, window_bounds = array<i64: 1, 128>}, {transform_indices = @transform_8, window_bounds = array<i64: 8, 128>}]} {
    %c0 = arith.constant 0 : index
    %c0_0 = arith.constant 0 : index
    %0 = vector.load %arg1[%c0, %c0_0] : memref<8x1xi32, #tpu.memory_space<vmem>>, vector<8x1xi32>
    %1 = tpu.iota {dimensions = array<i32: 1>} : vector<8x128xi32>
    %2 = vector.broadcast %0 : vector<8x1xi32> to vector<8x128xi32>
    %3 = arith.cmpi eq, %1, %2 : vector<8x128xi32>
    %4 = arith.extui %3 : vector<8x128xi1> to vector<8x128xi32>
    %5 = arith.sitofp %4 : vector<8x128xi32> to vector<8x128xf32>
    %6 = arith.truncf %5 : vector<8x128xf32> to vector<8x128xbf16>
    %c0_1 = arith.constant 0 : index
    %c0_2 = arith.constant 0 : index
    %7 = vector.load %arg2[%c0_1, %c0_2] : memref<128x128xbf16, #tpu.memory_space<vmem>>, vector<128x128xbf16>
    %cst = arith.constant dense<0.000000e+00> : vector<8x128xf32>
    %8 = tpu.matmul %6, %7, %cst {dimension_numbers = #tpu.dot_dimension_numbers<[1], [0], [0], [1], [0, 0, 1, 1], [], []>} : vector<8x128xbf16>, vector<128x128xbf16>, vector<8x128xf32> -> vector<8x128xf32>
    %9 = arith.truncf %8 : vector<8x128xf32> to vector<8x128xbf16>
    %c0_3 = arith.constant 0 : index
    %c0_4 = arith.constant 0 : index
    %10 = vector.load %arg3[%c0_3, %c0_4] : memref<128x512xbf16, #tpu.memory_space<vmem>>, vector<128x512xbf16>
    %cst_5 = arith.constant dense<0.000000e+00> : vector<8x512xf32>
    %11 = tpu.matmul %9, %10, %cst_5 {dimension_numbers = #tpu.dot_dimension_numbers<[1], [0], [0], [1], [0, 0, 1, 1], [], []>} : vector<8x128xbf16>, vector<128x512xbf16>, vector<8x512xf32> -> vector<8x512xf32>
    %c0_6 = arith.constant 0 : index
    %c0_7 = arith.constant 0 : index
    %12 = vector.load %arg4[%c0_6, %c0_7] : memref<1x512xf32, #tpu.memory_space<vmem>>, vector<1x512xf32>
    %13 = vector.broadcast %12 : vector<1x512xf32> to vector<8x512xf32>
    %14 = arith.addf %11, %13 : vector<8x512xf32>
    %cst_8 = arith.constant 0.000000e+00 : f32
    %15 = vector.broadcast %cst_8 : f32 to vector<8x512xf32>
    %16 = arith.maximumf %14, %15 : vector<8x512xf32>
    %17 = arith.truncf %16 : vector<8x512xf32> to vector<8x512xbf16>
    %c0_9 = arith.constant 0 : index
    %c0_10 = arith.constant 0 : index
    %18 = vector.load %arg5[%c0_9, %c0_10] : memref<512x256xbf16, #tpu.memory_space<vmem>>, vector<512x256xbf16>
    %cst_11 = arith.constant dense<0.000000e+00> : vector<8x256xf32>
    %19 = tpu.matmul %17, %18, %cst_11 {dimension_numbers = #tpu.dot_dimension_numbers<[1], [0], [0], [1], [0, 0, 1, 1], [], []>} : vector<8x512xbf16>, vector<512x256xbf16>, vector<8x256xf32> -> vector<8x256xf32>
    %c0_12 = arith.constant 0 : index
    %c0_13 = arith.constant 0 : index
    %20 = vector.load %arg6[%c0_12, %c0_13] : memref<1x256xf32, #tpu.memory_space<vmem>>, vector<1x256xf32>
    %21 = vector.broadcast %20 : vector<1x256xf32> to vector<8x256xf32>
    %22 = arith.addf %19, %21 : vector<8x256xf32>
    %cst_14 = arith.constant 0.000000e+00 : f32
    %23 = vector.broadcast %cst_14 : f32 to vector<8x256xf32>
    %24 = arith.maximumf %22, %23 : vector<8x256xf32>
    %25 = arith.truncf %24 : vector<8x256xf32> to vector<8x256xbf16>
    %c0_15 = arith.constant 0 : index
    %c0_16 = arith.constant 0 : index
    %26 = vector.load %arg7[%c0_15, %c0_16] : memref<256x128xbf16, #tpu.memory_space<vmem>>, vector<256x128xbf16>
    %cst_17 = arith.constant dense<0.000000e+00> : vector<8x128xf32>
    %27 = tpu.matmul %25, %26, %cst_17 {dimension_numbers = #tpu.dot_dimension_numbers<[1], [0], [0], [1], [0, 0, 1, 1], [], []>} : vector<8x256xbf16>, vector<256x128xbf16>, vector<8x128xf32> -> vector<8x128xf32>
    %c0_18 = arith.constant 0 : index
    %c0_19 = arith.constant 0 : index
    %28 = vector.load %arg8[%c0_18, %c0_19] : memref<1x128xf32, #tpu.memory_space<vmem>>, vector<1x128xf32>
    %29 = vector.broadcast %28 : vector<1x128xf32> to vector<8x128xf32>
    %30 = arith.addf %27, %29 : vector<8x128xf32>
    %c0_20 = arith.constant 0 : index
    %c0_21 = arith.constant 0 : index
    %31 = vector.load %arg9[%c0_20, %c0_21] : memref<8x128xf32, #tpu.memory_space<vmem>>, vector<8x128xf32>
    tpu.vector_store %arg9[%c0_20, %c0_21], %30 {strides = array<i32>} : memref<8x128xf32, #tpu.memory_space<vmem>>, vector<8x128xf32>,
    return
  }
  func.func @transform_0(%arg0: i32) -> (i32, i32) {
    %c0_i32 = arith.constant 0 : i32
    %c0_i32_0 = arith.constant 0 : i32
    return %arg0, %c0_i32 : i32, i32
  }
  func.func @transform_1(%arg0: i32) -> (i32, i32) {
    %c0_i32 = arith.constant 0 : i32
    %c0_i32_0 = arith.constant 0 : i32
    %c0_i32_1 = arith.constant 0 : i32
    return %c0_i32, %c0_i32_0 : i32, i32
  }
  func.func @transform_2(%arg0: i32) -> (i32, i32) {
    %c0_i32 = arith.constant 0 : i32
    %c0_i32_0 = arith.constant 0 : i32
    %c0_i32_1 = arith.constant 0 : i32
    return %c0_i32, %c0_i32_0 : i32, i32
  }
  func.func @transform_3(%arg0: i32) -> (i32, i32) {
    %c0_i32 = arith.constant 0 : i32
    %c0_i32_0 = arith.constant 0 : i32
    %c0_i32_1 = arith.constant 0 : i32
    return %c0_i32, %c0_i32_0 : i32, i32
  }
  func.func @transform_4(%arg0: i32) -> (i32, i32) {
    %c0_i32 = arith.constant 0 : i32
    %c0_i32_0 = arith.constant 0 : i32
    %c0_i32_1 = arith.constant 0 : i32
    return %c0_i32, %c0_i32_0 : i32, i32
  }
  func.func @transform_5(%arg0: i32) -> (i32, i32) {
    %c0_i32 = arith.constant 0 : i32
    %c0_i32_0 = arith.constant 0 : i32
    %c0_i32_1 = arith.constant 0 : i32
    return %c0_i32, %c0_i32_0 : i32, i32
  }
  func.func @transform_6(%arg0: i32) -> (i32, i32) {
    %c0_i32 = arith.constant 0 : i32
    %c0_i32_0 = arith.constant 0 : i32
    %c0_i32_1 = arith.constant 0 : i32
    return %c0_i32, %c0_i32_0 : i32, i32
  }
  func.func @transform_7(%arg0: i32) -> (i32, i32) {
    %c0_i32 = arith.constant 0 : i32
    %c0_i32_0 = arith.constant 0 : i32
    %c0_i32_1 = arith.constant 0 : i32
    return %c0_i32, %c0_i32_0 : i32, i32
  }
  func.func @transform_8(%arg0: i32) -> (i32, i32) {
    %c0_i32 = arith.constant 0 : i32
    %c0_i32_0 = arith.constant 0 : i32
    return %arg0, %c0_i32 : i32, i32
  }
}

</mosaic_0001>

<llo_original>
// kernel: tpu_custom_call.1
$region0: #{tpu_custom_call.1}
  #allocation0 [shape = 'u32[]', space=smem, size = 0x4, offset = 0x4, fixed_abs, tag = 'smem constant byte address 0x4 - core index']
  #allocation1 [shape = 'u32[144,128]{1,0:T(1,128)}', space=vmem, size = 0x12000, scoped, tag = 'internal scratch']
  %s0 = inlined_call_operand.vmem [shape: s32[8,1], index: 0, kind: input, shape index: {}]
  %s1 = inlined_call_operand.hbm [shape: bf16[128,128], index: 1, kind: input, shape index: {}]
  %s2 = inlined_call_operand.hbm [shape: bf16[128,512], index: 2, kind: input, shape index: {}]
  %s3 = inlined_call_operand.vmem [shape: f32[1,512], index: 3, kind: input, shape index: {}]
  %s4 = inlined_call_operand.hbm [shape: bf16[512,256], index: 4, kind: input, shape index: {}]
  %s5 = inlined_call_operand.vmem [shape: f32[1,256], index: 5, kind: input, shape index: {}]
  %s6 = inlined_call_operand.hbm [shape: bf16[256,128], index: 6, kind: input, shape index: {}]
  %s7 = inlined_call_operand.vmem [shape: f32[1,128], index: 7, kind: input, shape index: {}]
  %s8 = inlined_call_operand.hbm [shape: f32[8,128], index: 8, kind: output, shape index: {}]
  %s9 = sld [smem:[#allocation0]]
  $region58: #{tpu_custom_call.1} parent=0
    _
  %s11 = ssub.s32 1, %s9
  %s12 = scalar_select 0, %s11, %s9
  $region1: #{tpu_custom_call.1} parent=0
    #allocation2 [shape = 'u8[32768]{0}', space=vmem, size = 0x8000, scoped, tag = 'input window, operand 1, single buffered']
    #allocation3 [shape = 's32[1]{0}', space=sflag, size = 0x4, scoped, tag = 'scoped memory for tpu_custom_call.1']
    #allocation4 [shape = 's32[1]{0}', space=sflag, size = 0x4, scoped, tag = 'scoped memory for tpu_custom_call.1']
    #allocation5 [shape = 'u8[131072]{0}', space=vmem, size = 0x20000, scoped, tag = 'input window, operand 2, single buffered']
    #allocation6 [shape = 's32[1]{0}', space=sflag, size = 0x4, scoped, tag = 'scoped memory for tpu_custom_call.1']
    #allocation7 [shape = 'u8[262144]{0}', space=vmem, size = 0x40000, scoped, tag = 'input window, operand 4, single buffered']
    #allocation8 [shape = 'u8[65536]{0}', space=vmem, size = 0x10000, scoped, tag = 'input window, operand 6, single buffered']
    #allocation9 [shape = 's32[1]{0}', space=sflag, size = 0x4, scoped, tag = 'scoped memory for tpu_custom_call.1']
    #allocation10 [shape = 'u8[4096]{0}', space=vmem, size = 0x1000, scoped, tag = 'output window, operand 0, single buffered']
    %13 = vsyncpa [#allocation3], 0
    %14 = vsyncpa [#allocation6], 0
    %15 = vsyncpa [#allocation9], 0
    %16 = vsyncpa [#allocation4], 0
    // Predicated region
    $region2: #{tpu_custom_call.1} parent=1 // pred_check
      _
    $region3: #{tpu_custom_call.1} parent=1 // pred_check_branch
      %18 = sbr.rel (0) target = $region5
    $region4: #{tpu_custom_call.1} parent=1 // pred_region
      _
    $region5: #{tpu_custom_call.1} parent=1 // pred_fallthru
      _
    // Predicated region
    $region6: #{tpu_custom_call.1} parent=1 // pred_check
      _
    $region7: #{tpu_custom_call.1} parent=1 // pred_check_branch
      %20 = sbr.rel (0) target = $region9
    $region8: #{tpu_custom_call.1} parent=1 // pred_region
      %s22 = ssub.s32 1024, 1024
      %23 = vsyncadd [#allocation3], %s22
      %s24 = sshll.u32 [#allocation2], 4
      %s25 = int_to_ptr.vmem [resolvable:$true] %s24
      %30 = dma.hbm_to_vmem [thread:$0]  %s1, 1024, %s25, [#allocation3], 64, 64, 4
    $region9: #{tpu_custom_call.1} parent=1 // pred_fallthru
      _
    // Predicated region
    $region10: #{tpu_custom_call.1} parent=1 // pred_check
      _
    $region11: #{tpu_custom_call.1} parent=1 // pred_check_branch
      %32 = sbr.rel (0) target = $region13
    $region12: #{tpu_custom_call.1} parent=1 // pred_region
      %s34 = ssub.s32 4096, 4096
      %35 = vsyncadd [#allocation6], %s34
      %s36 = sshll.u32 [#allocation5], 4
      %s37 = int_to_ptr.vmem [resolvable:$true] %s36
      %42 = dma.hbm_to_vmem [thread:$0]  %s2, 4096, %s37, [#allocation6], 256, 256, 16
    $region13: #{tpu_custom_call.1} parent=1 // pred_fallthru
      _
    // Predicated region
    $region14: #{tpu_custom_call.1} parent=1 // pred_check
      _
    $region15: #{tpu_custom_call.1} parent=1 // pred_check_branch
      %44 = sbr.rel (0) target = $region17
    $region16: #{tpu_custom_call.1} parent=1 // pred_region
      _
    $region17: #{tpu_custom_call.1} parent=1 // pred_fallthru
      _
    // Predicated region
    $region18: #{tpu_custom_call.1} parent=1 // pred_check
      _
    $region19: #{tpu_custom_call.1} parent=1 // pred_check_branch
      %46 = sbr.rel (0) target = $region21
    $region20: #{tpu_custom_call.1} parent=1 // pred_region
      %s48 = ssub.s32 8192, 8192
      %49 = vsyncadd [#allocation6], %s48
      %s50 = sshll.u32 [#allocation7], 4
      %s51 = int_to_ptr.vmem [resolvable:$true] %s50
      %56 = dma.hbm_to_vmem [thread:$0]  %s4, 8192, %s51, [#allocation6], 128, 128, 8
    $region21: #{tpu_custom_call.1} parent=1 // pred_fallthru
      _
    // Predicated region
    $region22: #{tpu_custom_call.1} parent=1 // pred_check
      _
    $region23: #{tpu_custom_call.1} parent=1 // pred_check_branch
      %58 = sbr.rel (0) target = $region25
    $region24: #{tpu_custom_call.1} parent=1 // pred_region
      _
    $region25: #{tpu_custom_call.1} parent=1 // pred_fallthru
      _
    // Predicated region
    $region26: #{tpu_custom_call.1} parent=1 // pred_check
      _
    $region27: #{tpu_custom_call.1} parent=1 // pred_check_branch
      %60 = sbr.rel (0) target = $region29
    $region28: #{tpu_custom_call.1} parent=1 // pred_region
      %s62 = ssub.s32 2048, 2048
      %63 = vsyncadd [#allocation9], %s62
      %s64 = sshll.u32 [#allocation8], 4
      %s65 = int_to_ptr.vmem [resolvable:$true] %s64
      %70 = dma.hbm_to_vmem [thread:$0]  %s6, 2048, %s65, [#allocation9], 64, 64, 4
    $region29: #{tpu_custom_call.1} parent=1 // pred_fallthru
      _
    // Predicated region
    $region30: #{tpu_custom_call.1} parent=1 // pred_check
      _
    $region31: #{tpu_custom_call.1} parent=1 // pred_check_branch
      %72 = sbr.rel (0) target = $region33
    $region32: #{tpu_custom_call.1} parent=1 // pred_region
      _
    $region33: #{tpu_custom_call.1} parent=1 // pred_fallthru
      _
    // Predicated region
    $region34: #{tpu_custom_call.1} parent=1 // pred_check
      _
    $region35: #{tpu_custom_call.1} parent=1 // pred_check_branch
      %74 = sbr.rel (0) target = $region37
    $region36: #{tpu_custom_call.1} parent=1 // pred_region
      %75 = dma.done [#allocation3], 1024
    $region37: #{tpu_custom_call.1} parent=1 // pred_fallthru
      _
    // Predicated region
    $region38: #{tpu_custom_call.1} parent=1 // pred_check
      _
    $region39: #{tpu_custom_call.1} parent=1 // pred_check_branch
      %77 = sbr.rel (0) target = $region41
    $region40: #{tpu_custom_call.1} parent=1 // pred_region
      %78 = dma.done [#allocation6], 4096
    $region41: #{tpu_custom_call.1} parent=1 // pred_fallthru
      _
    // Predicated region
    $region42: #{tpu_custom_call.1} parent=1 // pred_check
      _
    $region43: #{tpu_custom_call.1} parent=1 // pred_check_branch
      %80 = sbr.rel (0) target = $region45
    $region44: #{tpu_custom_call.1} parent=1 // pred_region
      %81 = dma.done [#allocation6], 8192
    $region45: #{tpu_custom_call.1} parent=1 // pred_fallthru
      _
    // Predicated region
    $region46: #{tpu_custom_call.1} parent=1 // pred_check
      _
    $region47: #{tpu_custom_call.1} parent=1 // pred_check_branch
      %83 = sbr.rel (0) target = $region49
    $region48: #{tpu_custom_call.1} parent=1 // pred_region
      %84 = dma.done [#allocation9], 2048
    $region49: #{tpu_custom_call.1} parent=1 // pred_fallthru
      _
    %v86 = vld [vmem:[%s0] sm:$0xff]
    %v87 = vlaneseq
    %v88 = vand.u32 %v87, 127
    %89 = vset.pattern.permute.xlu0 0
    %90 = vperm.xlu0 %89, %v86
    %v91 = vpop.permute.xlu0 %90
    %vm92 = vcmp.eq.s32.totalorder %v88, %v91
    %v93 = vsel %vm92, 1, 0
    %v94 = vcvt.s32.f32 %v93
    %v95 = vpack.c.bf16 %v94, %v94
    %v96 = vld [vmem:[#allocation2] sm:$0xf]
    %v97 = vld [vmem:[#allocation2 + $0x4] sm:$0xf]
    %v98 = vld [vmem:[#allocation2 + $0x8] sm:$0xf]
    %v99 = vld [vmem:[#allocation2 + $0xc] sm:$0xf]
    %v100 = vld [vmem:[#allocation2 + $0x10] sm:$0xf]
    %v101 = vld [vmem:[#allocation2 + $0x14] sm:$0xf]
    %v102 = vld [vmem:[#allocation2 + $0x18] sm:$0xf]
    %v103 = vld [vmem:[#allocation2 + $0x1c] sm:$0xf]
    %v104 = vld [vmem:[#allocation2 + $0x20] sm:$0xf]
    %v105 = vld [vmem:[#allocation2 + $0x24] sm:$0xf]
    %v106 = vld [vmem:[#allocation2 + $0x28] sm:$0xf]
    %v107 = vld [vmem:[#allocation2 + $0x2c] sm:$0xf]
    %v108 = vld [vmem:[#allocation2 + $0x30] sm:$0xf]
    %v109 = vld [vmem:[#allocation2 + $0x34] sm:$0xf]
    %v110 = vld [vmem:[#allocation2 + $0x38] sm:$0xf]
    %v111 = vld [vmem:[#allocation2 + $0x3c] sm:$0xf]
    %v128 = vunpack.c.l.b16 %v96
    %v129 = vunpack.c.l.b16 %v97
    %v130 = vunpack.c.l.b16 %v98
    %v131 = vunpack.c.l.b16 %v99
    %v132 = vunpack.c.l.b16 %v100
    %v133 = vunpack.c.l.b16 %v101
    %v134 = vunpack.c.l.b16 %v102
    %v135 = vunpack.c.l.b16 %v103
    %v136 = vunpack.c.l.b16 %v104
    %v137 = vunpack.c.l.b16 %v105
    %v138 = vunpack.c.l.b16 %v106
    %v139 = vunpack.c.l.b16 %v107
    %v140 = vunpack.c.l.b16 %v108
    %v141 = vunpack.c.l.b16 %v109
    %v142 = vunpack.c.l.b16 %v110
    %v143 = vunpack.c.l.b16 %v111
    %v144 = vpack.c.b16 %v129, %v128
    %v145 = vpack.c.b16 %v131, %v130
    %v146 = vpack.c.b16 %v133, %v132
    %v147 = vpack.c.b16 %v135, %v134
    %v148 = vpack.c.b16 %v137, %v136
    %v149 = vpack.c.b16 %v139, %v138
    %v150 = vpack.c.b16 %v141, %v140
    %v151 = vpack.c.b16 %v143, %v142
    %160 = vmatprep.subr.bf16.mxu0 0
    %161 = vmatpush1.bf16.msra.mxu0 %v144
    %162 = vmatprep.subr.bf16.mxu0 0
    %163 = vmatpush1.bf16.msra.mxu0 %v145
    %164 = vmatprep.subr.bf16.mxu0 0
    %165 = vmatpush1.bf16.msra.mxu0 %v146
    %166 = vmatprep.subr.bf16.mxu0 0
    %167 = vmatpush1.bf16.msra.mxu0 %v147
    %168 = vmatprep.subr.bf16.mxu0 0
    %169 = vmatpush1.bf16.msra.mxu0 %v148
    %170 = vmatprep.subr.bf16.mxu0 0
    %171 = vmatpush1.bf16.msra.mxu0 %v149
    %172 = vmatprep.subr.bf16.mxu0 0
    %173 = vmatpush1.bf16.msra.mxu0 %v150
    %174 = vmatprep.subr.bf16.mxu0 0
    %175 = vmatpush1.bf16.msra.mxu0 %v151
    %176 = vmatprep.subr.bf16.mxu0 0
    %177 = vmatpush1.bf16.msra.mxu0 0
    %178 = vmatprep.subr.bf16.mxu0 0
    %179 = vmatpush1.bf16.msra.mxu0 0
    %180 = vmatprep.subr.bf16.mxu0 0
    %181 = vmatpush1.bf16.msra.mxu0 0
    %182 = vmatprep.subr.bf16.mxu0 0
    %183 = vmatpush1.bf16.msra.mxu0 0
    %184 = vmatprep.subr.bf16.mxu0 0
    %185 = vmatpush1.bf16.msra.mxu0 0
    %186 = vmatprep.subr.bf16.mxu0 0
    %187 = vmatpush1.bf16.msra.mxu0 0
    %188 = vmatprep.subr.bf16.mxu0 0
    %189 = vmatpush1.bf16.msra.mxu0 0
    %190 = vmatprep.subr.bf16.mxu0 0
    %191 = vmatpush1.bf16.msra.mxu0 0
    %192 = vmatprep.mubr.bf16.mxu0 0
    %193 = vmatmul.mubr.bf16.gmra.mrb[0].mxu0 %v95
    %v194 = vpop.f32.mrb[0].mxu0
    %v195 = vadd.f32 0.0, %v194
    %v196 = vpop.f32.mrb[0].mxu0
    %v197 = vpop.f32.mrb[0].mxu0
    %v198 = vpop.f32.mrb[0].mxu0
    %199 = vdwg.mxu0
    %v200 = vpack.c.bf16 %v195, %v195
    %v201 = vld [vmem:[#allocation5] sm:$0xff]
    %v202 = vld [vmem:[#allocation5 + $0x8] sm:$0xff]
    %v203 = vld [vmem:[#allocation5 + $0x10] sm:$0xff]
    %v204 = vld [vmem:[#allocation5 + $0x18] sm:$0xff]
    %v205 = vld [vmem:[#allocation5 + $0x20] sm:$0xff]
    %v206 = vld [vmem:[#allocation5 + $0x28] sm:$0xff]
    %v207 = vld [vmem:[#allocation5 + $0x30] sm:$0xff]
    %v208 = vld [vmem:[#allocation5 + $0x38] sm:$0xff]
    %v209 = vld [vmem:[#allocation5 + $0x40] sm:$0xff]
    %v210 = vld [vmem:[#allocation5 + $0x48] sm:$0xff]
    %v211 = vld [vmem:[#allocation5 + $0x50] sm:$0xff]
    %v212 = vld [vmem:[#allocation5 + $0x58] sm:$0xff]
    %v213 = vld [vmem:[#allocation5 + $0x60] sm:$0xff]
    %v214 = vld [vmem:[#allocation5 + $0x68] sm:$0xff]
    %v215 = vld [vmem:[#allocation5 + $0x70] sm:$0xff]
    %v216 = vld [vmem:[#allocation5 + $0x78] sm:$0xff]
    %v217 = vld [vmem:[#allocation5 + $0x80] sm:$0xff]
    %v218 = vld [vmem:[#allocation5 + $0x88] sm:$0xff]
    %v219 = vld [vmem:[#allocation5 + $0x90] sm:$0xff]
    %v220 = vld [vmem:[#allocation5 + $0x98] sm:$0xff]
    %v221 = vld [vmem:[#allocation5 + $0xa0] sm:$0xff]
    %v222 = vld [vmem:[#allocation5 + $0xa8] sm:$0xff]
    %v223 = vld [vmem:[#allocation5 + $0xb0] sm:$0xff]
    %v224 = vld [vmem:[#allocation5 + $0xb8] sm:$0xff]
    %v225 = vld [vmem:[#allocation5 + $0xc0] sm:$0xff]
    %v226 = vld [vmem:[#allocation5 + $0xc8] sm:$0xff]
    %v227 = vld [vmem:[#allocation5 + $0xd0] sm:$0xff]
    %v228 = vld [vmem:[#allocation5 + $0xd8] sm:$0xff]
    %v229 = vld [vmem:[#allocation5 + $0xe0] sm:$0xff]
    %v230 = vld [vmem:[#allocation5 + $0xe8] sm:$0xff]
    %v231 = vld [vmem:[#allocation5 + $0xf0] sm:$0xff]
    %v232 = vld [vmem:[#allocation5 + $0xf8] sm:$0xff]
    %v233 = vld [vmem:[%s3] sm:$0xf]
    %v235 = vlaneseq
    %v236 = vshrl.u32 %v235, 7
    %v237 = vsub.s32 0, %v236
    %v238 = vrot.slane %v233, %v237
    %v239 = vlaneseq
    %v240 = vshrl.u32 %v239, 7
    %v241 = vsub.s32 1, %v240
    %v242 = vrot.slane %v233, %v241
    %v243 = vlaneseq
    %v244 = vshrl.u32 %v243, 7
    %v245 = vsub.s32 2, %v244
    %v246 = vrot.slane %v233, %v245
    %v247 = vlaneseq
    %v248 = vshrl.u32 %v247, 7
    %v249 = vsub.s32 3, %v248
    %v250 = vrot.slane %v233, %v249
    %v287 = vunpack.c.l.b16 %v201
    %v288 = vunpack.c.h.b16 %v201
    %v289 = vunpack.c.l.b16 %v202
    %v290 = vunpack.c.h.b16 %v202
    %v291 = vunpack.c.l.b16 %v203
    %v292 = vunpack.c.h.b16 %v203
    %v293 = vunpack.c.l.b16 %v204
    %v294 = vunpack.c.h.b16 %v204
    %v295 = vunpack.c.l.b16 %v205
    %v296 = vunpack.c.h.b16 %v205
    %v297 = vunpack.c.l.b16 %v206
    %v298 = vunpack.c.h.b16 %v206
    %v299 = vunpack.c.l.b16 %v207
    %v300 = vunpack.c.h.b16 %v207
    %v301 = vunpack.c.l.b16 %v208
    %v302 = vunpack.c.h.b16 %v208
    %v303 = vunpack.c.l.b16 %v209
    %v304 = vunpack.c.h.b16 %v209
    %v305 = vunpack.c.l.b16 %v210
    %v306 = vunpack.c.h.b16 %v210
    %v307 = vunpack.c.l.b16 %v211
    %v308 = vunpack.c.h.b16 %v211
    %v309 = vunpack.c.l.b16 %v212
    %v310 = vunpack.c.h.b16 %v212
    %v311 = vunpack.c.l.b16 %v213
    %v312 = vunpack.c.h.b16 %v213
    %v313 = vunpack.c.l.b16 %v214
    %v314 = vunpack.c.h.b16 %v214
    %v315 = vunpack.c.l.b16 %v215
    %v316 = vunpack.c.h.b16 %v215
    %v317 = vunpack.c.l.b16 %v216
    %v318 = vunpack.c.h.b16 %v216
    %v319 = vunpack.c.l.b16 %v217
    %v320 = vunpack.c.h.b16 %v217
    %v321 = vunpack.c.l.b16 %v218
    %v322 = vunpack.c.h.b16 %v218
    %v323 = vunpack.c.l.b16 %v219
    %v324 = vunpack.c.h.b16 %v219
    %v325 = vunpack.c.l.b16 %v220
    %v326 = vunpack.c.h.b16 %v220
    %v327 = vunpack.c.l.b16 %v221
    %v328 = vunpack.c.h.b16 %v221
    %v329 = vunpack.c.l.b16 %v222
    %v330 = vunpack.c.h.b16 %v222
    %v331 = vunpack.c.l.b16 %v223
    %v332 = vunpack.c.h.b16 %v223
    %v333 = vunpack.c.l.b16 %v224
    %v334 = vunpack.c.h.b16 %v224
    %v335 = vunpack.c.l.b16 %v225
    %v336 = vunpack.c.h.b16 %v225
    %v337 = vunpack.c.l.b16 %v226
    %v338 = vunpack.c.h.b16 %v226
    %v339 = vunpack.c.l.b16 %v227
    %v340 = vunpack.c.h.b16 %v227
    %v341 = vunpack.c.l.b16 %v228
    %v342 = vunpack.c.h.b16 %v228
    %v343 = vunpack.c.l.b16 %v229
    %v344 = vunpack.c.h.b16 %v229
    %v345 = vunpack.c.l.b16 %v230
    %v346 = vunpack.c.h.b16 %v230
    %v347 = vunpack.c.l.b16 %v231
    %v348 = vunpack.c.h.b16 %v231
    %v349 = vunpack.c.l.b16 %v232
    %v350 = vunpack.c.h.b16 %v232
    %v351 = vpack.c.b16 %v291, %v287
    %v352 = vpack.c.b16 %v292, %v288
    %v353 = vpack.c.b16 %v293, %v289
    %v354 = vpack.c.b16 %v294, %v290
    %v355 = vpack.c.b16 %v299, %v295
    %v356 = vpack.c.b16 %v300, %v296
    %v357 = vpack.c.b16 %v301, %v297
    %v358 = vpack.c.b16 %v302, %v298
    %v359 = vpack.c.b16 %v307, %v303
    %v360 = vpack.c.b16 %v308, %v304
    %v361 = vpack.c.b16 %v309, %v305
    %v362 = vpack.c.b16 %v310, %v306
    %v363 = vpack.c.b16 %v315, %v311
    %v364 = vpack.c.b16 %v316, %v312
    %v365 = vpack.c.b16 %v317, %v313
    %v366 = vpack.c.b16 %v318, %v314
    %v367 = vpack.c.b16 %v323, %v319
    %v368 = vpack.c.b16 %v324, %v320
    %v369 = vpack.c.b16 %v325, %v321
    %v370 = vpack.c.b16 %v326, %v322
    %v371 = vpack.c.b16 %v331, %v327
    %v372 = vpack.c.b16 %v332, %v328
    %v373 = vpack.c.b16 %v333, %v329
    %v374 = vpack.c.b16 %v334, %v330
    %v375 = vpack.c.b16 %v339, %v335
    %v376 = vpack.c.b16 %v340, %v336
    %v377 = vpack.c.b16 %v341, %v337
    %v378 = vpack.c.b16 %v342, %v338
    %v379 = vpack.c.b16 %v347, %v343
    %v380 = vpack.c.b16 %v348, %v344
    %v381 = vpack.c.b16 %v349, %v345
    %v382 = vpack.c.b16 %v350, %v346
    %415 = vmatprep.subr.bf16.mxu0 %v352
    %416 = vmatpush1.bf16.msra.mxu0 %v351
    %417 = vmatprep.subr.bf16.mxu0 %v356
    %418 = vmatpush1.bf16.msra.mxu0 %v355
    %419 = vmatprep.subr.bf16.mxu0 %v360
    %420 = vmatpush1.bf16.msra.mxu0 %v359
    %421 = vmatprep.subr.bf16.mxu0 %v364
    %422 = vmatpush1.bf16.msra.mxu0 %v363
    %423 = vmatprep.subr.bf16.mxu0 %v368
    %424 = vmatpush1.bf16.msra.mxu0 %v367
    %425 = vmatprep.subr.bf16.mxu0 %v372
    %426 = vmatpush1.bf16.msra.mxu0 %v371
    %427 = vmatprep.subr.bf16.mxu0 %v376
    %428 = vmatpush1.bf16.msra.mxu0 %v375
    %429 = vmatprep.subr.bf16.mxu0 %v380
    %430 = vmatpush1.bf16.msra.mxu0 %v379
    %431 = vmatprep.subr.bf16.mxu0 0
    %432 = vmatpush1.bf16.msra.mxu0 0
    %433 = vmatprep.subr.bf16.mxu0 0
    %434 = vmatpush1.bf16.msra.mxu0 0
    %435 = vmatprep.subr.bf16.mxu0 0
    %436 = vmatpush1.bf16.msra.mxu0 0
    %437 = vmatprep.subr.bf16.mxu0 0
    %438 = vmatpush1.bf16.msra.mxu0 0
    %439 = vmatprep.subr.bf16.mxu0 0
    %440 = vmatpush1.bf16.msra.mxu0 0
    %441 = vmatprep.subr.bf16.mxu0 0
    %442 = vmatpush1.bf16.msra.mxu0 0
    %443 = vmatprep.subr.bf16.mxu0 0
    %444 = vmatpush1.bf16.msra.mxu0 0
    %445 = vmatprep.subr.bf16.mxu0 0
    %446 = vmatpush1.bf16.msra.mxu0 0
    %447 = vmatprep.mubr.bf16.mxu0 0
    %448 = vmatmul.mubr.bf16.gmra.mrb[0].mxu0 %v200
    %v449 = vpop.f32.mrb[0].mxu0
    %v450 = vadd.f32 %v238, %v449
    %v451 = vpop.f32.mrb[0].mxu0
    %v452 = vadd.f32 %v242, %v451
    %v453 = vpop.f32.mrb[0].mxu0
    %v454 = vpop.f32.mrb[0].mxu0
    %455 = vdwg.mxu0
    %456 = vmatprep.subr.bf16.mxu0 %v354
    %457 = vmatpush1.bf16.msra.mxu0 %v353
    %458 = vmatprep.subr.bf16.mxu0 %v358
    %459 = vmatpush1.bf16.msra.mxu0 %v357
    %460 = vmatprep.subr.bf16.mxu0 %v362
    %461 = vmatpush1.bf16.msra.mxu0 %v361
    %462 = vmatprep.subr.bf16.mxu0 %v366
    %463 = vmatpush1.bf16.msra.mxu0 %v365
    %464 = vmatprep.subr.bf16.mxu0 %v370
    %465 = vmatpush1.bf16.msra.mxu0 %v369
    %466 = vmatprep.subr.bf16.mxu0 %v374
    %467 = vmatpush1.bf16.msra.mxu0 %v373
    %468 = vmatprep.subr.bf16.mxu0 %v378
    %469 = vmatpush1.bf16.msra.mxu0 %v377
    %470 = vmatprep.subr.bf16.mxu0 %v382
    %471 = vmatpush1.bf16.msra.mxu0 %v381
    %472 = vmatprep.subr.bf16.mxu0 0
    %473 = vmatpush1.bf16.msra.mxu0 0
    %474 = vmatprep.subr.bf16.mxu0 0
    %475 = vmatpush1.bf16.msra.mxu0 0
    %476 = vmatprep.subr.bf16.mxu0 0
    %477 = vmatpush1.bf16.msra.mxu0 0
    %478 = vmatprep.subr.bf16.mxu0 0
    %479 = vmatpush1.bf16.msra.mxu0 0
    %480 = vmatprep.subr.bf16.mxu0 0
    %481 = vmatpush1.bf16.msra.mxu0 0
    %482 = vmatprep.subr.bf16.mxu0 0
    %483 = vmatpush1.bf16.msra.mxu0 0
    %484 = vmatprep.subr.bf16.mxu0 0
    %485 = vmatpush1.bf16.msra.mxu0 0
    %486 = vmatprep.subr.bf16.mxu0 0
    %487 = vmatpush1.bf16.msra.mxu0 0
    %488 = vmatprep.mubr.bf16.mxu0 0
    %489 = vmatmul.mubr.bf16.gmra.mrb[0].mxu0 %v200
    %v490 = vpop.f32.mrb[0].mxu0
    %v491 = vadd.f32 %v246, %v490
    %v492 = vpop.f32.mrb[0].mxu0
    %v493 = vadd.f32 %v250, %v492
    %v494 = vpop.f32.mrb[0].mxu0
    %v495 = vpop.f32.mrb[0].mxu0
    %496 = vdwg.mxu0
    %v497 = vmax.f32 %v450, 0.0
    %v498 = vmax.f32 %v452, 0.0
    %v499 = vmax.f32 %v491, 0.0
    %v500 = vmax.f32 %v493, 0.0
    %v501 = vpack.c.bf16 %v497, %v497
    %v502 = vpack.c.bf16 %v498, %v498
    %v503 = vpack.c.bf16 %v499, %v499
    %v504 = vpack.c.bf16 %v500, %v500
    %v505 = vld [vmem:[#allocation7] sm:$0xff]
    %v506 = vld [vmem:[#allocation7 + $0x8] sm:$0xff]
    %v507 = vld [vmem:[#allocation7 + $0x10] sm:$0xff]
    %v508 = vld [vmem:[#allocation7 + $0x18] sm:$0xff]
    %v509 = vld [vmem:[#allocation7 + $0x20] sm:$0xff]
    %v510 = vld [vmem:[#allocation7 + $0x28] sm:$0xff]
    %v511 = vld [vmem:[#allocation7 + $0x30] sm:$0xff]
    %v512 = vld [vmem:[#allocation7 + $0x38] sm:$0xff]
    %v513 = vld [vmem:[#allocation7 + $0x40] sm:$0xff]
    %v514 = vld [vmem:[#allocation7 + $0x48] sm:$0xff]
    %v515 = vld [vmem:[#allocation7 + $0x50] sm:$0xff]
    %v516 = vld [vmem:[#allocation7 + $0x58] sm:$0xff]
    %v517 = vld [vmem:[#allocation7 + $0x60] sm:$0xff]
    %v518 = vld [vmem:[#allocation7 + $0x68] sm:$0xff]
    %v519 = vld [vmem:[#allocation7 + $0x70] sm:$0xff]
    %v520 = vld [vmem:[#allocation7 + $0x78] sm:$0xff]
    %v521 = vld [vmem:[#allocation7 + $0x80] sm:$0xff]
    %v522 = vld [vmem:[#allocation7 + $0x88] sm:$0xff]
    %v523 = vld [vmem:[#allocation7 + $0x90] sm:$0xff]
    %v524 = vld [vmem:[#allocation7 + $0x98] sm:$0xff]
    %v525 = vld [vmem:[#allocation7 + $0xa0] sm:$0xff]
    %v526 = vld [vmem:[#allocation7 + $0xa8] sm:$0xff]
    %v527 = vld [vmem:[#allocation7 + $0xb0] sm:$0xff]
    %v528 = vld [vmem:[#allocation7 + $0xb8] sm:$0xff]
    %v529 = vld [vmem:[#allocation7 + $0xc0] sm:$0xff]
    %v530 = vld [vmem:[#allocation7 + $0xc8] sm:$0xff]
    %v531 = vld [vmem:[#allocation7 + $0xd0] sm:$0xff]
    %v532 = vld [vmem:[#allocation7 + $0xd8] sm:$0xff]
    %v533 = vld [vmem:[#allocation7 + $0xe0] sm:$0xff]
    %v534 = vld [vmem:[#allocation7 + $0xe8] sm:$0xff]
    %v535 = vld [vmem:[#allocation7 + $0xf0] sm:$0xff]
    %v536 = vld [vmem:[#allocation7 + $0xf8] sm:$0xff]
    %v537 = vld [vmem:[#allocation7 + $0x100] sm:$0xff]
    %v538 = vld [vmem:[#allocation7 + $0x108] sm:$0xff]
    %v539 = vld [vmem:[#allocation7 + $0x110] sm:$0xff]
    %v540 = vld [vmem:[#allocation7 + $0x118] sm:$0xff]
    %v541 = vld [vmem:[#allocation7 + $0x120] sm:$0xff]
    %v542 = vld [vmem:[#allocation7 + $0x128] sm:$0xff]
    %v543 = vld [vmem:[#allocation7 + $0x130] sm:$0xff]
    %v544 = vld [vmem:[#allocation7 + $0x138] sm:$0xff]
    %v545 = vld [vmem:[#allocation7 + $0x140] sm:$0xff]
    %v546 = vld [vmem:[#allocation7 + $0x148] sm:$0xff]
    %v547 = vld [vmem:[#allocation7 + $0x150] sm:$0xff]
    %v548 = vld [vmem:[#allocation7 + $0x158] sm:$0xff]
    %v549 = vld [vmem:[#allocation7 + $0x160] sm:$0xff]
    %v550 = vld [vmem:[#allocation7 + $0x168] sm:$0xff]
    %v551 = vld [vmem:[#allocation7 + $0x170] sm:$0xff]
    %v552 = vld [vmem:[#allocation7 + $0x178] sm:$0xff]
    %v553 = vld [vmem:[#allocation7 + $0x180] sm:$0xff]
    %v554 = vld [vmem:[#allocation7 + $0x188] sm:$0xff]
    %v555 = vld [vmem:[#allocation7 + $0x190] sm:$0xff]
    %v556 = vld [vmem:[#allocation7 + $0x198] sm:$0xff]
    %v557 = vld [vmem:[#allocation7 + $0x1a0] sm:$0xff]
    %v558 = vld [vmem:[#allocation7 + $0x1a8] sm:$0xff]
    %v559 = vld [vmem:[#allocation7 + $0x1b0] sm:$0xff]
    %v560 = vld [vmem:[#allocation7 + $0x1b8] sm:$0xff]
    %v561 = vld [vmem:[#allocation7 + $0x1c0] sm:$0xff]
    %v562 = vld [vmem:[#allocation7 + $0x1c8] sm:$0xff]
    %v563 = vld [vmem:[#allocation7 + $0x1d0] sm:$0xff]
    %v564 = vld [vmem:[#allocation7 + $0x1d8] sm:$0xff]
    %v565 = vld [vmem:[#allocation7 + $0x1e0] sm:$0xff]
    %v566 = vld [vmem:[#allocation7 + $0x1e8] sm:$0xff]
    %v567 = vld [vmem:[#allocation7 + $0x1f0] sm:$0xff]
    %v568 = vld [vmem:[#allocation7 + $0x1f8] sm:$0xff]
    %v569 = vld [vmem:[%s5] sm:$0x3]
    %v571 = vlaneseq
    %v572 = vshrl.u32 %v571, 7
    %v573 = vsub.s32 0, %v572
    %v574 = vrot.slane %v569, %v573
    %v575 = vlaneseq
    %v576 = vshrl.u32 %v575, 7
    %v577 = vsub.s32 1, %v576
    %v578 = vrot.slane %v569, %v577
    %v645 = vunpack.c.l.b16 %v505
    %v646 = vunpack.c.h.b16 %v505
    %v647 = vunpack.c.l.b16 %v506
    %v648 = vunpack.c.h.b16 %v506
    %v649 = vunpack.c.l.b16 %v507
    %v650 = vunpack.c.h.b16 %v507
    %v651 = vunpack.c.l.b16 %v508
    %v652 = vunpack.c.h.b16 %v508
    %v653 = vunpack.c.l.b16 %v509
    %v654 = vunpack.c.h.b16 %v509
    %v655 = vunpack.c.l.b16 %v510
    %v656 = vunpack.c.h.b16 %v510
    %v657 = vunpack.c.l.b16 %v511
    %v658 = vunpack.c.h.b16 %v511
    %v659 = vunpack.c.l.b16 %v512
    %v660 = vunpack.c.h.b16 %v512
    %v661 = vunpack.c.l.b16 %v513
    %v662 = vunpack.c.h.b16 %v513
    %v663 = vunpack.c.l.b16 %v514
    %v664 = vunpack.c.h.b16 %v514
    %v665 = vunpack.c.l.b16 %v515
    %v666 = vunpack.c.h.b16 %v515
    %v667 = vunpack.c.l.b16 %v516
    %v668 = vunpack.c.h.b16 %v516
    %v669 = vunpack.c.l.b16 %v517
    %v670 = vunpack.c.h.b16 %v517
    %v671 = vunpack.c.l.b16 %v518
    %v672 = vunpack.c.h.b16 %v518
    %v673 = vunpack.c.l.b16 %v519
    %v674 = vunpack.c.h.b16 %v519
    %v675 = vunpack.c.l.b16 %v520
    %v676 = vunpack.c.h.b16 %v520
    %v677 = vunpack.c.l.b16 %v521
    %v678 = vunpack.c.h.b16 %v521
    %v679 = vunpack.c.l.b16 %v522
    %v680 = vunpack.c.h.b16 %v522
    %v681 = vunpack.c.l.b16 %v523
    %v682 = vunpack.c.h.b16 %v523
    %v683 = vunpack.c.l.b16 %v524
    %v684 = vunpack.c.h.b16 %v524
    %v685 = vunpack.c.l.b16 %v525
    %v686 = vunpack.c.h.b16 %v525
    %v687 = vunpack.c.l.b16 %v526
    %v688 = vunpack.c.h.b16 %v526
    %v689 = vunpack.c.l.b16 %v527
    %v690 = vunpack.c.h.b16 %v527
    %v691 = vunpack.c.l.b16 %v528
    %v692 = vunpack.c.h.b16 %v528
    %v693 = vunpack.c.l.b16 %v529
    %v694 = vunpack.c.h.b16 %v529
    %v695 = vunpack.c.l.b16 %v530
    %v696 = vunpack.c.h.b16 %v530
    %v697 = vunpack.c.l.b16 %v531
    %v698 = vunpack.c.h.b16 %v531
    %v699 = vunpack.c.l.b16 %v532
    %v700 = vunpack.c.h.b16 %v532
    %v701 = vunpack.c.l.b16 %v533
    %v702 = vunpack.c.h.b16 %v533
    %v703 = vunpack.c.l.b16 %v534
    %v704 = vunpack.c.h.b16 %v534
    %v705 = vunpack.c.l.b16 %v535
    %v706 = vunpack.c.h.b16 %v535
    %v707 = vunpack.c.l.b16 %v536
    %v708 = vunpack.c.h.b16 %v536
    %v709 = vunpack.c.l.b16 %v537
    %v710 = vunpack.c.h.b16 %v537
    %v711 = vunpack.c.l.b16 %v538
    %v712 = vunpack.c.h.b16 %v538
    %v713 = vunpack.c.l.b16 %v539
    %v714 = vunpack.c.h.b16 %v539
    %v715 = vunpack.c.l.b16 %v540
    %v716 = vunpack.c.h.b16 %v540
    %v717 = vunpack.c.l.b16 %v541
    %v718 = vunpack.c.h.b16 %v541
    %v719 = vunpack.c.l.b16 %v542
    %v720 = vunpack.c.h.b16 %v542
    %v721 = vunpack.c.l.b16 %v543
    %v722 = vunpack.c.h.b16 %v543
    %v723 = vunpack.c.l.b16 %v544
    %v724 = vunpack.c.h.b16 %v544
    %v725 = vunpack.c.l.b16 %v545
    %v726 = vunpack.c.h.b16 %v545
    %v727 = vunpack.c.l.b16 %v546
    %v728 = vunpack.c.h.b16 %v546
    %v729 = vunpack.c.l.b16 %v547
    %v730 = vunpack.c.h.b16 %v547
    %v731 = vunpack.c.l.b16 %v548
    %v732 = vunpack.c.h.b16 %v548
    %v733 = vunpack.c.l.b16 %v549
    %v734 = vunpack.c.h.b16 %v549
    %v735 = vunpack.c.l.b16 %v550
    %v736 = vunpack.c.h.b16 %v550
    %v737 = vunpack.c.l.b16 %v551
    %v738 = vunpack.c.h.b16 %v551
    %v739 = vunpack.c.l.b16 %v552
    %v740 = vunpack.c.h.b16 %v552
    %v741 = vunpack.c.l.b16 %v553
    %v742 = vunpack.c.h.b16 %v553
    %v743 = vunpack.c.l.b16 %v554
    %v744 = vunpack.c.h.b16 %v554
    %v745 = vunpack.c.l.b16 %v555
    %v746 = vunpack.c.h.b16 %v555
    %v747 = vunpack.c.l.b16 %v556
    %v748 = vunpack.c.h.b16 %v556
    %v749 = vunpack.c.l.b16 %v557
    %v750 = vunpack.c.h.b16 %v557
    %v751 = vunpack.c.l.b16 %v558
    %v752 = vunpack.c.h.b16 %v558
    %v753 = vunpack.c.l.b16 %v559
    %v754 = vunpack.c.h.b16 %v559
    %v755 = vunpack.c.l.b16 %v560
    %v756 = vunpack.c.h.b16 %v560
    %v757 = vunpack.c.l.b16 %v561
    %v758 = vunpack.c.h.b16 %v561
    %v759 = vunpack.c.l.b16 %v562
    %v760 = vunpack.c.h.b16 %v562
    %v761 = vunpack.c.l.b16 %v563
    %v762 = vunpack.c.h.b16 %v563
    %v763 = vunpack.c.l.b16 %v564
    %v764 = vunpack.c.h.b16 %v564
    %v765 = vunpack.c.l.b16 %v565
    %v766 = vunpack.c.h.b16 %v565
    %v767 = vunpack.c.l.b16 %v566
    %v768 = vunpack.c.h.b16 %v566
    %v769 = vunpack.c.l.b16 %v567
    %v770 = vunpack.c.h.b16 %v567
    %v771 = vunpack.c.l.b16 %v568
    %v772 = vunpack.c.h.b16 %v568
    %v773 = vpack.c.b16 %v647, %v645
    %v774 = vpack.c.b16 %v648, %v646
    %v775 = vpack.c.b16 %v651, %v649
    %v776 = vpack.c.b16 %v652, %v650
    %v777 = vpack.c.b16 %v655, %v653
    %v778 = vpack.c.b16 %v656, %v654
    %v779 = vpack.c.b16 %v659, %v657
    %v780 = vpack.c.b16 %v660, %v658
    %v781 = vpack.c.b16 %v663, %v661
    %v782 = vpack.c.b16 %v664, %v662
    %v783 = vpack.c.b16 %v667, %v665
    %v784 = vpack.c.b16 %v668, %v666
    %v785 = vpack.c.b16 %v671, %v669
    %v786 = vpack.c.b16 %v672, %v670
    %v787 = vpack.c.b16 %v675, %v673
    %v788 = vpack.c.b16 %v676, %v674
    %v789 = vpack.c.b16 %v679, %v677
    %v790 = vpack.c.b16 %v680, %v678
    %v791 = vpack.c.b16 %v683, %v681
    %v792 = vpack.c.b16 %v684, %v682
    %v793 = vpack.c.b16 %v687, %v685
    %v794 = vpack.c.b16 %v688, %v686
    %v795 = vpack.c.b16 %v691, %v689
    %v796 = vpack.c.b16 %v692, %v690
    %v797 = vpack.c.b16 %v695, %v693
    %v798 = vpack.c.b16 %v696, %v694
    %v799 = vpack.c.b16 %v699, %v697
    %v800 = vpack.c.b16 %v700, %v698
    %v801 = vpack.c.b16 %v703, %v701
    %v802 = vpack.c.b16 %v704, %v702
    %v803 = vpack.c.b16 %v707, %v705
    %v804 = vpack.c.b16 %v708, %v706
    %v805 = vpack.c.b16 %v711, %v709
    %v806 = vpack.c.b16 %v712, %v710
    %v807 = vpack.c.b16 %v715, %v713
    %v808 = vpack.c.b16 %v716, %v714
    %v809 = vpack.c.b16 %v719, %v717
    %v810 = vpack.c.b16 %v720, %v718
    %v811 = vpack.c.b16 %v723, %v721
    %v812 = vpack.c.b16 %v724, %v722
    %v813 = vpack.c.b16 %v727, %v725
    %v814 = vpack.c.b16 %v728, %v726
    %v815 = vpack.c.b16 %v731, %v729
    %v816 = vpack.c.b16 %v732, %v730
    %v817 = vpack.c.b16 %v735, %v733
    %v818 = vpack.c.b16 %v736, %v734
    %v819 = vpack.c.b16 %v739, %v737
    %v820 = vpack.c.b16 %v740, %v738
    %v821 = vpack.c.b16 %v743, %v741
    %v822 = vpack.c.b16 %v744, %v742
    %v823 = vpack.c.b16 %v747, %v745
    %v824 = vpack.c.b16 %v748, %v746
    %v825 = vpack.c.b16 %v751, %v749
    %v826 = vpack.c.b16 %v752, %v750
    %v827 = vpack.c.b16 %v755, %v753
    %v828 = vpack.c.b16 %v756, %v754
    %v829 = vpack.c.b16 %v759, %v757
    %v830 = vpack.c.b16 %v760, %v758
    %v831 = vpack.c.b16 %v763, %v761
    %v832 = vpack.c.b16 %v764, %v762
    %v833 = vpack.c.b16 %v767, %v765
    %v834 = vpack.c.b16 %v768, %v766
    %v835 = vpack.c.b16 %v771, %v769
    %v836 = vpack.c.b16 %v772, %v770
    %901 = vmatprep.subr.bf16.mxu0 %v774
    %902 = vmatpush1.bf16.msra.mxu0 %v773
    %903 = vmatprep.subr.bf16.mxu0 %v776
    %904 = vmatpush1.bf16.msra.mxu0 %v775
    %905 = vmatprep.subr.bf16.mxu0 %v778
    %906 = vmatpush1.bf16.msra.mxu0 %v777
    %907 = vmatprep.subr.bf16.mxu0 %v780
    %908 = vmatpush1.bf16.msra.mxu0 %v779
    %909 = vmatprep.subr.bf16.mxu0 %v782
    %910 = vmatpush1.bf16.msra.mxu0 %v781
    %911 = vmatprep.subr.bf16.mxu0 %v784
    %912 = vmatpush1.bf16.msra.mxu0 %v783
    %913 = vmatprep.subr.bf16.mxu0 %v786
    %914 = vmatpush1.bf16.msra.mxu0 %v785
    %915 = vmatprep.subr.bf16.mxu0 %v788
    %916 = vmatpush1.bf16.msra.mxu0 %v787
    %917 = vmatprep.subr.bf16.mxu0 %v790
    %918 = vmatpush1.bf16.msra.mxu0 %v789
    %919 = vmatprep.subr.bf16.mxu0 %v792
    %920 = vmatpush1.bf16.msra.mxu0 %v791
    %921 = vmatprep.subr.bf16.mxu0 %v794
    %922 = vmatpush1.bf16.msra.mxu0 %v793
    %923 = vmatprep.subr.bf16.mxu0 %v796
    %924 = vmatpush1.bf16.msra.mxu0 %v795
    %925 = vmatprep.subr.bf16.mxu0 %v798
    %926 = vmatpush1.bf16.msra.mxu0 %v797
    %927 = vmatprep.subr.bf16.mxu0 %v800
    %928 = vmatpush1.bf16.msra.mxu0 %v799
    %929 = vmatprep.subr.bf16.mxu0 %v802
    %930 = vmatpush1.bf16.msra.mxu0 %v801
    %931 = vmatprep.subr.bf16.mxu0 %v804
    %932 = vmatpush1.bf16.msra.mxu0 %v803
    %933 = vmatprep.mubr.bf16.mxu0 %v502
    %934 = vmatmul.mubr.bf16.gmra.mrb[0].mxu0 %v501
    %v935 = vpop.f32.mrb[0].mxu0
    %v936 = vadd.f32 %v574, %v935
    %v937 = vpop.f32.mrb[0].mxu0
    %v938 = vadd.f32 %v578, %v937
    %v939 = vpop.f32.mrb[0].mxu0
    %v940 = vpop.f32.mrb[0].mxu0
    %941 = vdwg.mxu0
    %942 = vmatprep.subr.bf16.mxu0 %v806
    %943 = vmatpush1.bf16.msra.mxu0 %v805
    %944 = vmatprep.subr.bf16.mxu0 %v808
    %945 = vmatpush1.bf16.msra.mxu0 %v807
    %946 = vmatprep.subr.bf16.mxu0 %v810
    %947 = vmatpush1.bf16.msra.mxu0 %v809
    %948 = vmatprep.subr.bf16.mxu0 %v812
    %949 = vmatpush1.bf16.msra.mxu0 %v811
    %950 = vmatprep.subr.bf16.mxu0 %v814
    %951 = vmatpush1.bf16.msra.mxu0 %v813
    %952 = vmatprep.subr.bf16.mxu0 %v816
    %953 = vmatpush1.bf16.msra.mxu0 %v815
    %954 = vmatprep.subr.bf16.mxu0 %v818
    %955 = vmatpush1.bf16.msra.mxu0 %v817
    %956 = vmatprep.subr.bf16.mxu0 %v820
    %957 = vmatpush1.bf16.msra.mxu0 %v819
    %958 = vmatprep.subr.bf16.mxu0 %v822
    %959 = vmatpush1.bf16.msra.mxu0 %v821
    %960 = vmatprep.subr.bf16.mxu0 %v824
    %961 = vmatpush1.bf16.msra.mxu0 %v823
    %962 = vmatprep.subr.bf16.mxu0 %v826
    %963 = vmatpush1.bf16.msra.mxu0 %v825
    %964 = vmatprep.subr.bf16.mxu0 %v828
    %965 = vmatpush1.bf16.msra.mxu0 %v827
    %966 = vmatprep.subr.bf16.mxu0 %v830
    %967 = vmatpush1.bf16.msra.mxu0 %v829
    %968 = vmatprep.subr.bf16.mxu0 %v832
    %969 = vmatpush1.bf16.msra.mxu0 %v831
    %970 = vmatprep.subr.bf16.mxu0 %v834
    %971 = vmatpush1.bf16.msra.mxu0 %v833
    %972 = vmatprep.subr.bf16.mxu0 %v836
    %973 = vmatpush1.bf16.msra.mxu0 %v835
    %974 = vmatprep.mubr.bf16.mxu0 %v504
    %975 = vmatmul.mubr.bf16.gmra.mrb[0].mxu0 %v503
    %v976 = vpop.f32.mrb[0].mxu0
    %v977 = vadd.f32 %v936, %v976
    %v978 = vpop.f32.mrb[0].mxu0
    %v979 = vadd.f32 %v938, %v978
    %v980 = vpop.f32.mrb[0].mxu0
    %v981 = vpop.f32.mrb[0].mxu0
    %982 = vdwg.mxu0
    %v983 = vmax.f32 %v977, 0.0
    %v984 = vmax.f32 %v979, 0.0
    %v985 = vpack.c.bf16 %v983, %v983
    %v986 = vpack.c.bf16 %v984, %v984
    %v987 = vld [vmem:[#allocation8] sm:$0xf]
    %v988 = vld [vmem:[#allocation8 + $0x4] sm:$0xf]
    %v989 = vld [vmem:[#allocation8 + $0x8] sm:$0xf]
    %v990 = vld [vmem:[#allocation8 + $0xc] sm:$0xf]
    %v991 = vld [vmem:[#allocation8 + $0x10] sm:$0xf]
    %v992 = vld [vmem:[#allocation8 + $0x14] sm:$0xf]
    %v993 = vld [vmem:[#allocation8 + $0x18] sm:$0xf]
    %v994 = vld [vmem:[#allocation8 + $0x1c] sm:$0xf]
    %v995 = vld [vmem:[#allocation8 + $0x20] sm:$0xf]
    %v996 = vld [vmem:[#allocation8 + $0x24] sm:$0xf]
    %v997 = vld [vmem:[#allocation8 + $0x28] sm:$0xf]
    %v998 = vld [vmem:[#allocation8 + $0x2c] sm:$0xf]
    %v999 = vld [vmem:[#allocation8 + $0x30] sm:$0xf]
    %v1000 = vld [vmem:[#allocation8 + $0x34] sm:$0xf]
    %v1001 = vld [vmem:[#allocation8 + $0x38] sm:$0xf]
    %v1002 = vld [vmem:[#allocation8 + $0x3c] sm:$0xf]
    %v1003 = vld [vmem:[#allocation8 + $0x40] sm:$0xf]
    %v1004 = vld [vmem:[#allocation8 + $0x44] sm:$0xf]
    %v1005 = vld [vmem:[#allocation8 + $0x48] sm:$0xf]
    %v1006 = vld [vmem:[#allocation8 + $0x4c] sm:$0xf]
    %v1007 = vld [vmem:[#allocation8 + $0x50] sm:$0xf]
    %v1008 = vld [vmem:[#allocation8 + $0x54] sm:$0xf]
    %v1009 = vld [vmem:[#allocation8 + $0x58] sm:$0xf]
    %v1010 = vld [vmem:[#allocation8 + $0x5c] sm:$0xf]
    %v1011 = vld [vmem:[#allocation8 + $0x60] sm:$0xf]
    %v1012 = vld [vmem:[#allocation8 + $0x64] sm:$0xf]
    %v1013 = vld [vmem:[#allocation8 + $0x68] sm:$0xf]
    %v1014 = vld [vmem:[#allocation8 + $0x6c] sm:$0xf]
    %v1015 = vld [vmem:[#allocation8 + $0x70] sm:$0xf]
    %v1016 = vld [vmem:[#allocation8 + $0x74] sm:$0xf]
    %v1017 = vld [vmem:[#allocation8 + $0x78] sm:$0xf]
    %v1018 = vld [vmem:[#allocation8 + $0x7c] sm:$0xf]
    %v1019 = vld [vmem:[%s7] sm:$0x1]
    %v1021 = vlaneseq
    %v1022 = vshrl.u32 %v1021, 7
    %v1023 = vsub.s32 0, %v1022
    %v1024 = vrot.slane %v1019, %v1023
    %v1058 = vunpack.c.l.b16 %v987
    %v1059 = vunpack.c.l.b16 %v988
    %v1060 = vunpack.c.l.b16 %v989
    %v1061 = vunpack.c.l.b16 %v990
    %v1062 = vunpack.c.l.b16 %v991
    %v1063 = vunpack.c.l.b16 %v992
    %v1064 = vunpack.c.l.b16 %v993
    %v1065 = vunpack.c.l.b16 %v994
    %v1066 = vunpack.c.l.b16 %v995
    %v1067 = vunpack.c.l.b16 %v996
    %v1068 = vunpack.c.l.b16 %v997
    %v1069 = vunpack.c.l.b16 %v998
    %v1070 = vunpack.c.l.b16 %v999
    %v1071 = vunpack.c.l.b16 %v1000
    %v1072 = vunpack.c.l.b16 %v1001
    %v1073 = vunpack.c.l.b16 %v1002
    %v1074 = vunpack.c.l.b16 %v1003
    %v1075 = vunpack.c.l.b16 %v1004
    %v1076 = vunpack.c.l.b16 %v1005
    %v1077 = vunpack.c.l.b16 %v1006
    %v1078 = vunpack.c.l.b16 %v1007
    %v1079 = vunpack.c.l.b16 %v1008
    %v1080 = vunpack.c.l.b16 %v1009
    %v1081 = vunpack.c.l.b16 %v1010
    %v1082 = vunpack.c.l.b16 %v1011
    %v1083 = vunpack.c.l.b16 %v1012
    %v1084 = vunpack.c.l.b16 %v1013
    %v1085 = vunpack.c.l.b16 %v1014
    %v1086 = vunpack.c.l.b16 %v1015
    %v1087 = vunpack.c.l.b16 %v1016
    %v1088 = vunpack.c.l.b16 %v1017
    %v1089 = vunpack.c.l.b16 %v1018
    %v1090 = vpack.c.b16 %v1059, %v1058
    %v1091 = vpack.c.b16 %v1061, %v1060
    %v1092 = vpack.c.b16 %v1063, %v1062
    %v1093 = vpack.c.b16 %v1065, %v1064
    %v1094 = vpack.c.b16 %v1067, %v1066
    %v1095 = vpack.c.b16 %v1069, %v1068
    %v1096 = vpack.c.b16 %v1071, %v1070
    %v1097 = vpack.c.b16 %v1073, %v1072
    %v1098 = vpack.c.b16 %v1075, %v1074
    %v1099 = vpack.c.b16 %v1077, %v1076
    %v1100 = vpack.c.b16 %v1079, %v1078
    %v1101 = vpack.c.b16 %v1081, %v1080
    %v1102 = vpack.c.b16 %v1083, %v1082
    %v1103 = vpack.c.b16 %v1085, %v1084
    %v1104 = vpack.c.b16 %v1087, %v1086
    %v1105 = vpack.c.b16 %v1089, %v1088
    %1122 = vmatprep.subr.bf16.mxu0 0
    %1123 = vmatpush1.bf16.msra.mxu0 %v1090
    %1124 = vmatprep.subr.bf16.mxu0 0
    %1125 = vmatpush1.bf16.msra.mxu0 %v1091
    %1126 = vmatprep.subr.bf16.mxu0 0
    %1127 = vmatpush1.bf16.msra.mxu0 %v1092
    %1128 = vmatprep.subr.bf16.mxu0 0
    %1129 = vmatpush1.bf16.msra.mxu0 %v1093
    %1130 = vmatprep.subr.bf16.mxu0 0
    %1131 = vmatpush1.bf16.msra.mxu0 %v1094
    %1132 = vmatprep.subr.bf16.mxu0 0
    %1133 = vmatpush1.bf16.msra.mxu0 %v1095
    %1134 = vmatprep.subr.bf16.mxu0 0
    %1135 = vmatpush1.bf16.msra.mxu0 %v1096
    %1136 = vmatprep.subr.bf16.mxu0 0
    %1137 = vmatpush1.bf16.msra.mxu0 %v1097
    %1138 = vmatprep.subr.bf16.mxu0 0
    %1139 = vmatpush1.bf16.msra.mxu0 %v1098
    %1140 = vmatprep.subr.bf16.mxu0 0
    %1141 = vmatpush1.bf16.msra.mxu0 %v1099
    %1142 = vmatprep.subr.bf16.mxu0 0
    %1143 = vmatpush1.bf16.msra.mxu0 %v1100
    %1144 = vmatprep.subr.bf16.mxu0 0
    %1145 = vmatpush1.bf16.msra.mxu0 %v1101
    %1146 = vmatprep.subr.bf16.mxu0 0
    %1147 = vmatpush1.bf16.msra.mxu0 %v1102
    %1148 = vmatprep.subr.bf16.mxu0 0
    %1149 = vmatpush1.bf16.msra.mxu0 %v1103
    %1150 = vmatprep.subr.bf16.mxu0 0
    %1151 = vmatpush1.bf16.msra.mxu0 %v1104
    %1152 = vmatprep.subr.bf16.mxu0 0
    %1153 = vmatpush1.bf16.msra.mxu0 %v1105
    %1154 = vmatprep.mubr.bf16.mxu0 %v986
    %1155 = vmatmul.mubr.bf16.gmra.mrb[0].mxu0 %v985
    %v1156 = vpop.f32.mrb[0].mxu0
    %v1157 = vadd.f32 %v1024, %v1156
    %v1158 = vpop.f32.mrb[0].mxu0
    %v1159 = vpop.f32.mrb[0].mxu0
    %v1160 = vpop.f32.mrb[0].mxu0
    %1161 = vdwg.mxu0
    %1162 = vst [vmem:[#allocation10] sm:$0xff] %v1157
    // Predicated region
    $region50: #{tpu_custom_call.1} parent=1 // pred_check
      _
    $region51: #{tpu_custom_call.1} parent=1 // pred_check_branch
      %1164 = sbr.rel (0) target = $region53
    $region52: #{tpu_custom_call.1} parent=1 // pred_region
      %s1166 = ssub.s32 128, 128
      %1167 = vsyncadd [#allocation4], %s1166
      %s1169 = sshll.u32 [#allocation10], 4
      %s1170 = int_to_ptr.vmem [resolvable:$true] %s1169
      %1172 = dma.vmem_to_hbm [thread:$0]  %s1170, 128, %s8, [#allocation4]
    $region53: #{tpu_custom_call.1} parent=1 // pred_fallthru
      _
    // Predicated region
    $region54: #{tpu_custom_call.1} parent=1 // pred_check
      _
    $region55: #{tpu_custom_call.1} parent=1 // pred_check_branch
      %1174 = sbr.rel (0) target = $region57
    $region56: #{tpu_custom_call.1} parent=1 // pred_region
      %1175 = dma.done [#allocation4], 128
    $region57: #{tpu_custom_call.1} parent=1 // pred_fallthru
      _
    %1176 = vsyncpa [#allocation3], 1
    %1177 = vsyncpa [#allocation6], 1
    %1178 = vsyncpa [#allocation9], 1
    %1179 = vsyncpa [#allocation4], 1

</llo_original>
